<compile_context>
chip_gen: v7x
topology: tpu7x:2x2x1
jax: 0.10.0
libtpu: 0.0.40
codegen_flags: <defaults>
</compile_context>

<pallas_src>
import jax
import jax.numpy as jnp
from jax import lax
from jax.experimental import pallas as pl
from jax.experimental.pallas import tpu as pltpu


def _round_up(x, m):
    return ((x + m - 1) // m) * m


def _dfl_kernel(pred_ref, label_ref, out_ref):
    # Bins -> sublanes, rows -> lanes; cast AFTER the transpose so the cast
    # (and everything downstream) works on the compact (C, tn) form instead of
    # the lane-padded (tn, 17->128) tile.
    pt = jnp.transpose(pred_ref[...]).astype(jnp.float32)    # (C, tn)
    C, tn = pt.shape

    lbl = label_ref[...].astype(jnp.float32)                 # (1, tn)

    # Stable per-row logsumexp over the bin (sublane) axis.
    m = jnp.max(pt, axis=0, keepdims=True)                   # (1, tn)
    lse = m + jnp.log(jnp.sum(jnp.exp(pt - m), axis=0, keepdims=True))

    # Fused one-hot gathers via the hat function:
    #   wl*p[floor(l)] + wr*p[floor(l)+1] == sum_r max(0, 1 - |r - l|) * p[r]
    # for l in [0, C-1] (weight_left + weight_right == 1).
    rows = lax.broadcasted_iota(jnp.int32, (C, tn), 0).astype(jnp.float32)
    wmap = jnp.maximum(0.0, 1.0 - jnp.abs(rows - lbl))       # (C, tn)
    gathered = jnp.sum(wmap * pt, axis=0, keepdims=True)     # (1, tn)

    out_ref[...] = lse - gathered


def distribution_focal_loss_pallas(pred, label, *, block_n=8192):
    """Per-sample DFL loss, shape (N,). pred: (N, n+1) logits, label: (N,)."""
    N, C = pred.shape

    # Rows live on lanes for label/output -> block must be a multiple of 128.
    block = _round_up(min(block_n, _round_up(N, 128)), 128)
    grid = pl.cdiv(N, block)
    Np = grid * block             # lane extent for label/out (cheap pad)
    Nr = max(N, block)            # pred rows; pad ONLY when N < block (cheap)

    if Nr != N:
        pred = jnp.pad(pred, ((0, Nr - N), (0, 0)))
    label2d = jnp.pad(label.astype(jnp.float32), (0, Np - N)).reshape(1, Np)

    out = pl.pallas_call(
        _dfl_kernel,
        out_shape=jax.ShapeDtypeStruct((1, Np), jnp.float32),
        grid_spec=pltpu.PrefetchScalarGridSpec(
            num_scalar_prefetch=0,
            grid=(grid,),
            in_specs=[
                pl.BlockSpec((block, C), lambda i: (i, 0)),     # pred rows
                pl.BlockSpec((1, block), lambda i: (0, i)),     # label, lane-dense
            ],
            out_specs=pl.BlockSpec((1, block), lambda i: (0, i)),  # loss, lane-dense
        ),
        compiler_params=pltpu.CompilerParams(
            dimension_semantics=("parallel",),
            vmem_limit_bytes=48 << 20),
    )(pred, label2d)

    # Drop padded lanes BEFORE any reduction so mean/sum/avg_factor stay unbiased.
    return out.reshape(Np)[:N]


class DistributionFocalLoss:
    """JAX/Pallas port of the PyTorch DistributionFocalLoss module."""

    def __init__(self, reduction="mean", loss_weight=1.0):
        self.reduction = reduction
        self.loss_weight = loss_weight

    def __call__(self, pred, target, weight=None, avg_factor=None,
                 reduction_override=None):
        assert reduction_override in (None, "none", "mean", "sum")
        reduction = reduction_override if reduction_override else self.reduction

        loss = distribution_focal_loss_pallas(pred, target)     # (N,)

        # weighted_loss semantics (cheap glue outside the kernel hot path)
        if weight is not None:
            loss = loss * weight.astype(loss.dtype)

        if avg_factor is None:
            if reduction == "mean":
                loss = jnp.mean(loss)
            elif reduction == "sum":
                loss = jnp.sum(loss)
        else:
            if reduction == "mean":
                loss = jnp.sum(loss) / avg_factor
            elif reduction == "sum":
                raise ValueError('avg_factor can not be used with reduction="sum"')

        return self.loss_weight * loss


def _reference_dfl(pred, label):
    # pure-JAX reference for sanity checking
    dis_left = jnp.floor(label).astype(jnp.int32)
    dis_right = dis_left + 1
    wl = dis_right.astype(jnp.float32) - label
    wr = label - dis_left.astype(jnp.float32)
    logp = jax.nn.log_softmax(pred, axis=-1)
    ce_l = -jnp.take_along_axis(logp, dis_left[:, None], axis=1)[:, 0]
    ce_r = -jnp.take_along_axis(logp, dis_right[:, None], axis=1)[:, 0]
    return ce_l * wl + ce_r * wr


if __name__ == "__main__":
    key = jax.random.PRNGKey(0)
    k_pred, k_lbl = jax.random.split(key)

    N, C = 64, 17  # n = 16 integral bins -> pred has n+1 = 17 logits per sample
    pred = jax.random.normal(k_pred, (N, C), dtype=jnp.float32)
    # continuous target distances in [0, n) so dis_right stays in range
    label = jax.random.uniform(k_lbl, (N,), dtype=jnp.float32,
                               minval=0.0, maxval=float(C - 1) - 1e-3)

    loss_mod = DistributionFocalLoss(reduction="mean", loss_weight=1.0)
    out = loss_mod(pred, label)
    out = jax.block_until_ready(out)
    ref = jnp.mean(_reference_dfl(pred, label))
    assert jnp.allclose(out, ref, atol=1e-5, rtol=1e-5), (out, ref)

    # Exercise the no-pred-pad path: multi-step grid with a partial last block
    # (N=1000 not a multiple of block=256) and the unreduced output.
    k2p, k2l = jax.random.split(jax.random.PRNGKey(1))
    N2 = 1000
    pred2 = jax.random.normal(k2p, (N2, C), dtype=jnp.float32)
    label2 = jax.random.uniform(k2l, (N2,), dtype=jnp.float32,
                                minval=0.0, maxval=float(C - 1) - 1e-3)
    out2 = jax.block_until_ready(
        distribution_focal_loss_pallas(pred2, label2, block_n=256))
    ref2 = _reference_dfl(pred2, label2)
    assert jnp.allclose(out2, ref2, atol=1e-5, rtol=1e-5)

    print("KERNEL_OK")
</pallas_src>

<mosaic_0001>
module attributes {stable_mosaic.version = 11 : i64} {
  func.func @_dfl_kernel(%arg0: i32, %arg1: memref<128x17xf32, #tpu.memory_space<vmem>>, %arg2: memref<1x128xf32, #tpu.memory_space<vmem>>, %arg3: memref<1x128xf32, #tpu.memory_space<vmem>>) attributes {dimension_semantics = [#tpu.dimension_semantics<parallel>], iteration_bounds = array<i64: 1>, scalar_prefetch = 0 : i64, scratch_operands = 0 : i64, tpu.core_type = #tpu.core_type<tc>, window_params = [{transform_indices = @transform_0, window_bounds = array<i64: 128, 17>}, {transform_indices = @transform_1, window_bounds = array<i64: 1, 128>}, {transform_indices = @transform_2, window_bounds = array<i64: 1, 128>}]} {
    %c0 = arith.constant 0 : index
    %c0_0 = arith.constant 0 : index
    %0 = vector.load %arg1[%c0, %c0_0] : memref<128x17xf32, #tpu.memory_space<vmem>>, vector<128x17xf32>
    %1 = tpu.transpose %0, [1, 0] : vector<128x17xf32> -> vector<17x128xf32>
    %c0_1 = arith.constant 0 : index
    %c0_2 = arith.constant 0 : index
    %2 = vector.load %arg2[%c0_1, %c0_2] : memref<1x128xf32, #tpu.memory_space<vmem>>, vector<1x128xf32>
    %cst = arith.constant dense<0xFF800000> : vector<128xf32>
    %3 = vector.multi_reduction <maximumf>, %1, %cst [0] : vector<17x128xf32> to vector<128xf32>
    %4 = vector.shape_cast %3 : vector<128xf32> to vector<1x128xf32>
    %5 = vector.broadcast %4 : vector<1x128xf32> to vector<17x128xf32>
    %6 = arith.subf %1, %5 : vector<17x128xf32>
    %7 = math.exp %6 : vector<17x128xf32>
    %cst_3 = arith.constant dense<0.000000e+00> : vector<128xf32>
    %8 = vector.multi_reduction <add>, %7, %cst_3 [0] : vector<17x128xf32> to vector<128xf32>
    %9 = vector.shape_cast %8 : vector<128xf32> to vector<1x128xf32>
    %10 = math.log %9 : vector<1x128xf32>
    %11 = arith.addf %4, %10 : vector<1x128xf32>
    %12 = tpu.iota {dimensions = array<i32: 0>} : vector<17x128xi32>
    %13 = arith.sitofp %12 : vector<17x128xi32> to vector<17x128xf32>
    %14 = vector.broadcast %2 : vector<1x128xf32> to vector<17x128xf32>
    %15 = arith.subf %13, %14 : vector<17x128xf32>
    %16 = math.absf %15 : vector<17x128xf32>
    %cst_4 = arith.constant 1.000000e+00 : f32
    %17 = vector.broadcast %cst_4 : f32 to vector<17x128xf32>
    %18 = arith.subf %17, %16 : vector<17x128xf32>
    %cst_5 = arith.constant 0.000000e+00 : f32
    %19 = vector.broadcast %cst_5 : f32 to vector<17x128xf32>
    %20 = arith.maximumf %19, %18 : vector<17x128xf32>
    %21 = arith.mulf %20, %1 : vector<17x128xf32>
    %cst_6 = arith.constant dense<0.000000e+00> : vector<128xf32>
    %22 = vector.multi_reduction <add>, %21, %cst_6 [0] : vector<17x128xf32> to vector<128xf32>
    %23 = vector.shape_cast %22 : vector<128xf32> to vector<1x128xf32>
    %24 = arith.subf %11, %23 : vector<1x128xf32>
    %c0_7 = arith.constant 0 : index
    %c0_8 = arith.constant 0 : index
    %25 = vector.load %arg3[%c0_7, %c0_8] : memref<1x128xf32, #tpu.memory_space<vmem>>, vector<1x128xf32>
    tpu.vector_store %arg3[%c0_7, %c0_8], %24 {strides = array<i32>} : memref<1x128xf32, #tpu.memory_space<vmem>>, vector<1x128xf32>,
    return
  }
  func.func @transform_0(%arg0: i32) -> (i32, i32) {
    %c0_i32 = arith.constant 0 : i32
    %c0_i32_0 = arith.constant 0 : i32
    return %arg0, %c0_i32 : i32, i32
  }
  func.func @transform_1(%arg0: i32) -> (i32, i32) {
    %c0_i32 = arith.constant 0 : i32
    %c0_i32_0 = arith.constant 0 : i32
    return %c0_i32, %arg0 : i32, i32
  }
  func.func @transform_2(%arg0: i32) -> (i32, i32) {
    %c0_i32 = arith.constant 0 : i32
    %c0_i32_0 = arith.constant 0 : i32
    return %c0_i32, %arg0 : i32, i32
  }
}

</mosaic_0001>

<llo_original>
// kernel: tpu_custom_call.1
$region0: #{tpu_custom_call.1}
  #allocation0 [shape = 'u32[]', space=smem, size = 0x4, offset = 0x4, fixed_abs, tag = 'smem constant byte address 0x4 - core index']
  #allocation1 [shape = 'u32[144,128]{1,0:T(1,128)}', space=vmem, size = 0x12000, scoped, tag = 'internal scratch']
  %s0 = inlined_call_operand.vmem [shape: f32[128,17], index: 0, kind: input, shape index: {}]
  %s1 = inlined_call_operand.vmem [shape: f32[1,128], index: 1, kind: input, shape index: {}]
  %s2 = inlined_call_operand.hbm [shape: f32[1,128], index: 2, kind: output, shape index: {}]
  %s3 = sld [smem:[#allocation0]]
  $region18: #{tpu_custom_call.1} parent=0
    _
  %s5 = ssub.s32 1, %s3
  %s6 = scalar_select 0, %s5, %s3
  $region1: #{tpu_custom_call.1} parent=0
    #allocation2 [shape = 'u8[512]{0}', space=vmem, size = 0x400, scoped, tag = 'output window, operand 0, single buffered']
    #allocation3 [shape = 's32[1]{0}', space=sflag, size = 0x4, scoped, tag = 'scoped memory for tpu_custom_call.1']
    %7 = vsyncpa [#allocation3], 0
    // Predicated region
    $region2: #{tpu_custom_call.1} parent=1 // pred_check
      _
    $region3: #{tpu_custom_call.1} parent=1 // pred_check_branch
      %9 = sbr.rel (0) target = $region5
    $region4: #{tpu_custom_call.1} parent=1 // pred_region
      _
    $region5: #{tpu_custom_call.1} parent=1 // pred_fallthru
      _
    // Predicated region
    $region6: #{tpu_custom_call.1} parent=1 // pred_check
      _
    $region7: #{tpu_custom_call.1} parent=1 // pred_check_branch
      %11 = sbr.rel (0) target = $region9
    $region8: #{tpu_custom_call.1} parent=1 // pred_region
      _
    $region9: #{tpu_custom_call.1} parent=1 // pred_fallthru
      _
    %v12 = vld [vmem:[%s0] sm:$0xff]
    %v13 = vld [vmem:[%s0 + $0x8] sm:$0xff]
    %v14 = vld [vmem:[%s0 + $0x10] sm:$0xff]
    %v15 = vld [vmem:[%s0 + $0x18] sm:$0xff]
    %v16 = vld [vmem:[%s0 + $0x20] sm:$0xff]
    %v17 = vld [vmem:[%s0 + $0x28] sm:$0xff]
    %v18 = vld [vmem:[%s0 + $0x30] sm:$0xff]
    %v19 = vld [vmem:[%s0 + $0x38] sm:$0xff]
    %v20 = vld [vmem:[%s0 + $0x40] sm:$0xff]
    %v21 = vld [vmem:[%s0 + $0x48] sm:$0xff]
    %v22 = vld [vmem:[%s0 + $0x50] sm:$0xff]
    %v23 = vld [vmem:[%s0 + $0x58] sm:$0xff]
    %v24 = vld [vmem:[%s0 + $0x60] sm:$0xff]
    %v25 = vld [vmem:[%s0 + $0x68] sm:$0xff]
    %v26 = vld [vmem:[%s0 + $0x70] sm:$0xff]
    %v27 = vld [vmem:[%s0 + $0x78] sm:$0xff]
    %28 = vxpose.xlu0.b32.start [1/16] %v12, 128
    %29 = vxpose.xlu0.b32.cont [2/16] %v13, 128
    %30 = vxpose.xlu0.b32.cont [3/16] %v14, 128
    %31 = vxpose.xlu0.b32.cont [4/16] %v15, 128
    %32 = vxpose.xlu0.b32.cont [5/16] %v16, 128
    %33 = vxpose.xlu0.b32.cont [6/16] %v17, 128
    %34 = vxpose.xlu0.b32.cont [7/16] %v18, 128
    %35 = vxpose.xlu0.b32.cont [8/16] %v19, 128
    %36 = vxpose.xlu0.b32.cont [9/16] %v20, 128
    %37 = vxpose.xlu0.b32.cont [10/16] %v21, 128
    %38 = vxpose.xlu0.b32.cont [11/16] %v22, 128
    %39 = vxpose.xlu0.b32.cont [12/16] %v23, 128
    %40 = vxpose.xlu0.b32.cont [13/16] %v24, 128
    %41 = vxpose.xlu0.b32.cont [14/16] %v25, 128
    %42 = vxpose.xlu0.b32.cont [15/16] %v26, 128
    %43 = vxpose.xlu0.b32.end [16/16] %v27, 128
    %v44 = vpop.trf.xlu0
    %v45 = vpop.trf.xlu0
    %v46 = vpop.trf.xlu0
    %v47 = vpop.trf.xlu0
    %v48 = vpop.trf.xlu0
    %v49 = vpop.trf.xlu0
    %v50 = vpop.trf.xlu0
    %v51 = vpop.trf.xlu0
    %v52 = vpop.trf.xlu0
    %v53 = vpop.trf.xlu0
    %v54 = vpop.trf.xlu0
    %v55 = vpop.trf.xlu0
    %v56 = vpop.trf.xlu0
    %v57 = vpop.trf.xlu0
    %v58 = vpop.trf.xlu0
    %v59 = vpop.trf.xlu0
    %v60 = vld [vmem:[%s1] sm:$0x1]
    %vm61 = vcmask 1040384
    %v62 = vsel %vm61, %v46, -inf
    %v63 = vmax.f32 %v44, %v45
    %v64 = vmax.f32 %v63, %v62
    %v65 = vrot.slane %v64, 4
    %v66 = vmax.f32 %v64, %v65
    %v67 = vrot.slane %v66, 2
    %v68 = vmax.f32 %v66, %v67
    %v69 = vrot.slane %v68, 1
    %v70 = vmax.f32 %v68, %v69
    %v71 = vsub.f32 %v44, %v70
    %v72 = vsub.f32 %v45, %v70
    %v73 = vsub.f32 %v46, %v70
    %v74 = vmul.f32 %v71, 1.442695
    %v75 = vpow.pop %v74
    %v76 = vmul.f32 %v72, 1.442695
    %v77 = vpow.pop %v76
    %v78 = vmul.f32 %v73, 1.442695
    %v79 = vpow.pop %v78
    %v80 = vadd.f32 %v75, %v77
    %v81 = vsel %vm61, %v79, 0.0
    %v82 = vadd.f32 %v80, %v81
    %v83 = vrot.slane %v82, 4
    %v84 = vadd.f32 %v82, %v83
    %v85 = vrot.slane %v84, 2
    %v86 = vadd.f32 %v84, %v85
    %v87 = vrot.slane %v86, 1
    %v88 = vadd.f32 %v86, %v87
    %v89 = vlog2.pop %v88
    %v90 = vmul.f32 %v89, 0.6931472
    %v91 = vadd.f32 %v70, %v90
    %v92 = vlaneseq
    %v93 = vshrl.u32 %v92, 7
    %v94 = vadd.s32 %v93, 8
    %v95 = vadd.s32 %v93, 16
    %v96 = vcvt.s32.f32 %v93
    %v97 = vcvt.s32.f32 %v94
    %v98 = vcvt.s32.f32 %v95
    %v100 = vlaneseq
    %v101 = vshrl.u32 %v100, 7
    %v102 = vsub.s32 0, %v101
    %v103 = vrot.slane %v60, %v102
    %v105 = vsub.f32 %v96, %v103
    %v106 = vsub.f32 %v97, %v103
    %v107 = vsub.f32 %v98, %v103
    %v108 = vand.u32 2147483647, %v105
    %v109 = vand.u32 2147483647, %v106
    %v110 = vand.u32 2147483647, %v107
    %v111 = vsub.f32 1.0, %v108
    %v112 = vsub.f32 1.0, %v109
    %v113 = vsub.f32 1.0, %v110
    %v114 = vmax.f32 %v111, 0.0
    %v115 = vmax.f32 %v112, 0.0
    %v116 = vmax.f32 %v113, 0.0
    %v117 = vmul.f32 %v114, %v44
    %v118 = vmul.f32 %v115, %v45
    %v119 = vmul.f32 %v116, %v46
    %v120 = vadd.f32 %v117, %v118
    %v121 = vsel %vm61, %v119, 0.0
    %v122 = vadd.f32 %v120, %v121
    %v123 = vrot.slane %v122, 4
    %v124 = vadd.f32 %v122, %v123
    %v125 = vrot.slane %v124, 2
    %v126 = vadd.f32 %v124, %v125
    %v127 = vrot.slane %v126, 1
    %v128 = vadd.f32 %v126, %v127
    %v129 = vsub.f32 %v91, %v128
    %130 = vst [vmem:[#allocation2] sm:$0x1] %v129
    // Predicated region
    $region10: #{tpu_custom_call.1} parent=1 // pred_check
      _
    $region11: #{tpu_custom_call.1} parent=1 // pred_check_branch
      %132 = sbr.rel (0) target = $region13
    $region12: #{tpu_custom_call.1} parent=1 // pred_region
      %s134 = ssub.s32 16, 16
      %135 = vsyncadd [#allocation3], %s134
      %s137 = sshll.u32 [#allocation2], 4
      %s138 = int_to_ptr.vmem [resolvable:$true] %s137
      %140 = dma.vmem_to_hbm [thread:$0]  %s138, 16, %s2, [#allocation3]
    $region13: #{tpu_custom_call.1} parent=1 // pred_fallthru
      _
    // Predicated region
    $region14: #{tpu_custom_call.1} parent=1 // pred_check
      _
    $region15: #{tpu_custom_call.1} parent=1 // pred_check_branch
      %142 = sbr.rel (0) target = $region17
    $region16: #{tpu_custom_call.1} parent=1 // pred_region
      %143 = dma.done [#allocation3], 16
    $region17: #{tpu_custom_call.1} parent=1 // pred_fallthru
      _
    %144 = vsyncpa [#allocation3], 1

</llo_original>
